<compile_context>
chip_gen: v7x
topology: tpu7x:2x2x1
jax: 0.10.0
libtpu: 0.0.40
codegen_flags: <defaults>
</compile_context>

<pallas_src>
import jax
import jax.numpy as jnp
from jax import lax
from jax.experimental import pallas as pl
from jax.experimental.pallas import tpu as pltpu


def _round_up(x: int, m: int) -> int:
    return (x + m - 1) // m * m


def lm_mc_kernel(ids_ref, emb_t_ref, w_pool_t_ref, b_pool_ref, w_dec_ref,
                 b_dec_ref, out_ref):
    """One grid step scores TB rows of the flattened (bs*nc) batch.

    Feature-major layout: features ride the sublane axis, the batch tile rides
    the 128-wide lane axis.

    ids_ref      : VMEM (S, TB)    int32  -- token ids for this tile (transposed)
    emb_t_ref    : VMEM (Hp, Vp)   f32    -- embedding table, transposed + padded
    w_pool_t_ref : VMEM (Dp, Hp)   f32    -- pooler weight, transposed + padded
    b_pool_ref   : VMEM (Dp, 1)    f32
    w_dec_ref    : VMEM (Dp, 1)    f32    -- decoder weight column
    b_dec_ref    : SMEM (1,)       f32    -- decoder bias (scalar)
    out_ref      : VMEM (1, 1, TB) f32    -- lane-dense logits row for this tile
    """
    S, TB = ids_ref.shape
    Vp = emb_t_ref.shape[1]

    # ---- fused embedding gather + mean-pool as a one-hot MXU contraction ----
    # counts[v, b] = #{s : ids[s, b] == v}; full-width VPU compares only.
    vocab_iota = lax.broadcasted_iota(jnp.int32, (Vp, TB), 0)   # hoisted once
    counts = jnp.zeros((Vp, TB), jnp.float32)
    for s in range(S):                      # static unroll; S is a trace-time constant
        ids_row = ids_ref[s:s + 1, :]       # (1, TB) static slice (zero-cost view)
        counts = counts + jnp.where(ids_row == vocab_iota, 1.0, 0.0)
    # TODO(synk): for long sequences (S >= ~64) switch to
    #             lax.fori_loop(..., unroll=8) to avoid full-unroll code bloat.

    # pooled mean, feature-major: (Hp, TB) = emb^T @ counts, scaled by 1/S.
    pooled = jnp.dot(emb_t_ref[...], counts,
                     preferred_element_type=jnp.float32) * (1.0 / S)

    # pooler: sent = tanh(W_pool @ pooled + b_pool)   -> (Dp, TB)
    sent = jnp.tanh(
        jnp.dot(w_pool_t_ref[...], pooled, preferred_element_type=jnp.float32)
        + b_pool_ref[...])

    # dropout(p=0.1): identity at inference.
    # TODO(synk): training-mode dropout would use pltpu.prng_seed / prng_random_bits.

    # decoder nn.Linear(D, 1): VPU multiply + sublane (XLU) reduction.
    # Result is a lane-dense (1, TB) row -> single unmasked vector store.
    logits = jnp.sum(sent * w_dec_ref[...], axis=0, keepdims=True) + b_dec_ref[0]
    out_ref[...] = logits[None]             # (1, 1, TB)


def lm_for_multiple_choice(input_ids, params):
    """input_ids: (bs, nc, seq) int32 -> logits (bs, nc) float32."""
    bs, nc, seq = input_ids.shape
    B = bs * nc

    emb = params["embedding"].astype(jnp.float32)               # (V, H)
    w_pool = params["w_pool"].astype(jnp.float32)               # (H, D)
    b_pool = params["b_pool"].reshape(-1).astype(jnp.float32)   # (D,)
    w_dec = params["w_dec"].reshape(-1).astype(jnp.float32)     # (D,)
    b_dec = params["b_dec"].reshape(1).astype(jnp.float32)      # (1,)

    V, H = emb.shape
    D = w_pool.shape[1]
    Vp, Hp, Dp = _round_up(V, 128), _round_up(H, 128), _round_up(D, 128)

    # One-time weight transforms: transpose to feature-major and zero-pad every
    # feature dim to a multiple of 128 (padded rows/cols contribute nothing).
    # TODO(synk): store emb_t / matmul operands in bf16 for production vocab
    #             sizes (halves bandwidth + VMEM); kept f32 here so the
    #             correctness check against the f32 reference stays tight.
    emb_t = jnp.zeros((Hp, Vp), jnp.float32).at[:H, :V].set(emb.T)
    w_pool_t = jnp.zeros((Dp, Hp), jnp.float32).at[:D, :H].set(w_pool.T)
    b_pool_c = jnp.zeros((Dp, 1), jnp.float32).at[:D, 0].set(b_pool)
    w_dec_c = jnp.zeros((Dp, 1), jnp.float32).at[:D, 0].set(w_dec)

    # Batch tiling: the batch rides the lane axis.  Tiles of up to 128 rows
    # amortize the ~0.35us/step overhead; for B >= 256 the grid has >= 2
    # "parallel" steps so v7x's two TensorCores both get work.
    B8 = _round_up(B, 8)
    TB = B8 if B8 <= 128 else 128
    B_pad = _round_up(B, TB)
    grid = (B_pad // TB,)

    # Token ids transposed to (seq, batch); padded batch columns use token 0
    # and their logits are sliced away below.  Regular tiled VMEM input
    # (seq*TB*4 bytes per step) -- no whole-array SMEM scalar prefetch.
    flat_ids = input_ids.reshape(B, seq).astype(jnp.int32)
    ids_t = jnp.zeros((seq, B_pad), jnp.int32).at[:, :B].set(flat_ids.T)

    out = pl.pallas_call(
        lm_mc_kernel,
        out_shape=jax.ShapeDtypeStruct((grid[0], 1, TB), jnp.float32),
        grid_spec=pltpu.PrefetchScalarGridSpec(
            num_scalar_prefetch=0,
            grid=grid,
            in_specs=[
                pl.BlockSpec((seq, TB), lambda i: (0, i)),            # ids tile
                pl.BlockSpec(memory_space=pltpu.MemorySpace.VMEM),    # emb_t (resident)
                pl.BlockSpec(memory_space=pltpu.MemorySpace.VMEM),    # w_pool_t
                pl.BlockSpec(memory_space=pltpu.MemorySpace.VMEM),    # b_pool
                pl.BlockSpec(memory_space=pltpu.MemorySpace.VMEM),    # w_dec
                pl.BlockSpec(memory_space=pltpu.MemorySpace.SMEM),    # b_dec scalar
            ],
            out_specs=pl.BlockSpec((1, 1, TB), lambda i: (i, 0, 0)),
        ),
        compiler_params=pltpu.CompilerParams(
            dimension_semantics=("parallel",),   # batch tiles shard across TCs (v7x)
            # Footprint here is < 1 MiB.  For production-size tables raise this
            # toward ~96-112 MiB on v5e/v6e (128 MiB physical) and cap at
            # ~48-56 MiB on v7x (64 MiB physical) -- or move the table to HBM.
            vmem_limit_bytes=32 * 1024 * 1024,
        ),
    )(ids_t, emb_t, w_pool_t, b_pool_c, w_dec_c, b_dec)
    # TODO(synk): for production vocab sizes (table >> VMEM, esp. v7x's 64 MiB),
    #             keep the table in HBM (memory_space=pl.ANY) and double-buffer a
    #             DMA row-gather per tile instead of the one-hot contraction.

    return out.reshape(B_pad)[:B].reshape(bs, nc)


def reference_forward(input_ids, params):
    """Pure-JAX reference with identical semantics (for correctness check)."""
    bs, nc, seq = input_ids.shape
    flat = input_ids.reshape(bs * nc, seq)
    x = jnp.take(params["embedding"], flat, axis=0)         # (B, S, H)
    pooled = jnp.mean(x, axis=1)                            # (B, H)
    # TODO(synk): a mask-aware mean (ignoring padding tokens) would need an
    #             attention mask, as in the real TextEncoder.
    sent = jnp.tanh(
        jnp.dot(pooled, params["w_pool"], precision=lax.Precision.HIGHEST)
        + params["b_pool"])
    logits = jnp.dot(sent, params["w_dec"],
                     precision=lax.Precision.HIGHEST) + params["b_dec"]
    return logits.reshape(bs, nc)


def init_params(key, vocab=100, hidden=32, sent_dim=32):
    k0, k1, k2, k3, k4 = jax.random.split(key, 5)
    return {
        "embedding": jax.random.normal(k0, (vocab, hidden), jnp.float32) * 0.02,
        "w_pool": jax.random.normal(k1, (hidden, sent_dim), jnp.float32) * 0.02,
        "b_pool": jax.random.normal(k2, (1, sent_dim), jnp.float32) * 0.02,
        "w_dec": jax.random.normal(k3, (sent_dim, 1), jnp.float32) * 0.02,
        "b_dec": jax.random.normal(k4, (1, 1), jnp.float32) * 0.02,
    }


if __name__ == "__main__":
    key = jax.random.PRNGKey(0)
    bs, nc, seq, hidden = 2, 4, 8, 32

    params = init_params(key, vocab=100, hidden=hidden, sent_dim=hidden)
    input_ids = jax.random.randint(
        jax.random.fold_in(key, 7), (bs, nc, seq), 0, 100, dtype=jnp.int32
    )

    logits = lm_for_multiple_choice(input_ids, params)
    jax.block_until_ready(logits)

    assert logits.shape == (bs, nc), logits.shape
    assert logits.dtype == jnp.float32

    ref = reference_forward(input_ids, params)
    assert jnp.allclose(logits, ref, rtol=1e-3, atol=2e-5), (logits, ref)

    print("KERNEL_OK")
</pallas_src>

<mosaic_0001>
module attributes {stable_mosaic.version = 11 : i64} {
  func.func @lm_mc_kernel(%arg0: i32, %arg1: memref<8x8xi32, #tpu.memory_space<vmem>>, %arg2: memref<128x128xf32, #tpu.memory_space<vmem>>, %arg3: memref<128x128xf32, #tpu.memory_space<vmem>>, %arg4: memref<128x1xf32, #tpu.memory_space<vmem>>, %arg5: memref<128x1xf32, #tpu.memory_space<vmem>>, %arg6: memref<1xf32, #tpu.memory_space<smem>>, %arg7: memref<1x1x8xf32, #tpu.memory_space<vmem>>) attributes {dimension_semantics = [#tpu.dimension_semantics<parallel>], iteration_bounds = array<i64: 1>, scalar_prefetch = 0 : i64, scratch_operands = 0 : i64, tpu.core_type = #tpu.core_type<tc>, window_params = [{transform_indices = @transform_0, window_bounds = array<i64: 8, 8>}, {pipeline_mode = #tpu.pipeline_mode<synchronous>, transform_indices = @transform_1, window_bounds = array<i64: 128, 128>}, {pipeline_mode = #tpu.pipeline_mode<synchronous>, transform_indices = @transform_2, window_bounds = array<i64: 128, 128>}, {pipeline_mode = #tpu.pipeline_mode<synchronous>, transform_indices = @transform_3, window_bounds = array<i64: 128, 1>}, {pipeline_mode = #tpu.pipeline_mode<synchronous>, transform_indices = @transform_4, window_bounds = array<i64: 128, 1>}, {transform_indices = @transform_5, window_bounds = array<i64: 1>}, {transform_indices = @transform_6, window_bounds = array<i64: 1, 1, 8>}]} {
    %0 = tpu.iota {dimensions = array<i32: 0>} : vector<128x8xi32>
    %cst = arith.constant 0.000000e+00 : f32
    %1 = vector.broadcast %cst : f32 to vector<128x8xf32>
    %c0 = arith.constant 0 : index
    %c0_0 = arith.constant 0 : index
    %2 = vector.load %arg1[%c0, %c0_0] : memref<8x8xi32, #tpu.memory_space<vmem>>, vector<1x8xi32>
    %3 = vector.broadcast %2 : vector<1x8xi32> to vector<128x8xi32>
    %4 = arith.cmpi eq, %3, %0 : vector<128x8xi32>
    %cst_1 = arith.constant 1.000000e+00 : f32
    %cst_2 = arith.constant 0.000000e+00 : f32
    %5 = vector.broadcast %cst_1 : f32 to vector<128x8xf32>
    %6 = vector.broadcast %cst_2 : f32 to vector<128x8xf32>
    %7 = arith.select %4, %5, %6 : vector<128x8xi1>, vector<128x8xf32>
    %8 = arith.addf %1, %7 : vector<128x8xf32>
    %c1 = arith.constant 1 : index
    %c0_3 = arith.constant 0 : index
    %9 = vector.load %arg1[%c1, %c0_3] : memref<8x8xi32, #tpu.memory_space<vmem>>, vector<1x8xi32>
    %10 = vector.broadcast %9 : vector<1x8xi32> to vector<128x8xi32>
    %11 = arith.cmpi eq, %10, %0 : vector<128x8xi32>
    %cst_4 = arith.constant 1.000000e+00 : f32
    %cst_5 = arith.constant 0.000000e+00 : f32
    %12 = vector.broadcast %cst_4 : f32 to vector<128x8xf32>
    %13 = vector.broadcast %cst_5 : f32 to vector<128x8xf32>
    %14 = arith.select %11, %12, %13 : vector<128x8xi1>, vector<128x8xf32>
    %15 = arith.addf %8, %14 : vector<128x8xf32>
    %c2 = arith.constant 2 : index
    %c0_6 = arith.constant 0 : index
    %16 = vector.load %arg1[%c2, %c0_6] : memref<8x8xi32, #tpu.memory_space<vmem>>, vector<1x8xi32>
    %17 = vector.broadcast %16 : vector<1x8xi32> to vector<128x8xi32>
    %18 = arith.cmpi eq, %17, %0 : vector<128x8xi32>
    %cst_7 = arith.constant 1.000000e+00 : f32
    %cst_8 = arith.constant 0.000000e+00 : f32
    %19 = vector.broadcast %cst_7 : f32 to vector<128x8xf32>
    %20 = vector.broadcast %cst_8 : f32 to vector<128x8xf32>
    %21 = arith.select %18, %19, %20 : vector<128x8xi1>, vector<128x8xf32>
    %22 = arith.addf %15, %21 : vector<128x8xf32>
    %c3 = arith.constant 3 : index
    %c0_9 = arith.constant 0 : index
    %23 = vector.load %arg1[%c3, %c0_9] : memref<8x8xi32, #tpu.memory_space<vmem>>, vector<1x8xi32>
    %24 = vector.broadcast %23 : vector<1x8xi32> to vector<128x8xi32>
    %25 = arith.cmpi eq, %24, %0 : vector<128x8xi32>
    %cst_10 = arith.constant 1.000000e+00 : f32
    %cst_11 = arith.constant 0.000000e+00 : f32
    %26 = vector.broadcast %cst_10 : f32 to vector<128x8xf32>
    %27 = vector.broadcast %cst_11 : f32 to vector<128x8xf32>
    %28 = arith.select %25, %26, %27 : vector<128x8xi1>, vector<128x8xf32>
    %29 = arith.addf %22, %28 : vector<128x8xf32>
    %c4 = arith.constant 4 : index
    %c0_12 = arith.constant 0 : index
    %30 = vector.load %arg1[%c4, %c0_12] : memref<8x8xi32, #tpu.memory_space<vmem>>, vector<1x8xi32>
    %31 = vector.broadcast %30 : vector<1x8xi32> to vector<128x8xi32>
    %32 = arith.cmpi eq, %31, %0 : vector<128x8xi32>
    %cst_13 = arith.constant 1.000000e+00 : f32
    %cst_14 = arith.constant 0.000000e+00 : f32
    %33 = vector.broadcast %cst_13 : f32 to vector<128x8xf32>
    %34 = vector.broadcast %cst_14 : f32 to vector<128x8xf32>
    %35 = arith.select %32, %33, %34 : vector<128x8xi1>, vector<128x8xf32>
    %36 = arith.addf %29, %35 : vector<128x8xf32>
    %c5 = arith.constant 5 : index
    %c0_15 = arith.constant 0 : index
    %37 = vector.load %arg1[%c5, %c0_15] : memref<8x8xi32, #tpu.memory_space<vmem>>, vector<1x8xi32>
    %38 = vector.broadcast %37 : vector<1x8xi32> to vector<128x8xi32>
    %39 = arith.cmpi eq, %38, %0 : vector<128x8xi32>
    %cst_16 = arith.constant 1.000000e+00 : f32
    %cst_17 = arith.constant 0.000000e+00 : f32
    %40 = vector.broadcast %cst_16 : f32 to vector<128x8xf32>
    %41 = vector.broadcast %cst_17 : f32 to vector<128x8xf32>
    %42 = arith.select %39, %40, %41 : vector<128x8xi1>, vector<128x8xf32>
    %43 = arith.addf %36, %42 : vector<128x8xf32>
    %c6 = arith.constant 6 : index
    %c0_18 = arith.constant 0 : index
    %44 = vector.load %arg1[%c6, %c0_18] : memref<8x8xi32, #tpu.memory_space<vmem>>, vector<1x8xi32>
    %45 = vector.broadcast %44 : vector<1x8xi32> to vector<128x8xi32>
    %46 = arith.cmpi eq, %45, %0 : vector<128x8xi32>
    %cst_19 = arith.constant 1.000000e+00 : f32
    %cst_20 = arith.constant 0.000000e+00 : f32
    %47 = vector.broadcast %cst_19 : f32 to vector<128x8xf32>
    %48 = vector.broadcast %cst_20 : f32 to vector<128x8xf32>
    %49 = arith.select %46, %47, %48 : vector<128x8xi1>, vector<128x8xf32>
    %50 = arith.addf %43, %49 : vector<128x8xf32>
    %c7 = arith.constant 7 : index
    %c0_21 = arith.constant 0 : index
    %51 = vector.load %arg1[%c7, %c0_21] : memref<8x8xi32, #tpu.memory_space<vmem>>, vector<1x8xi32>
    %52 = vector.broadcast %51 : vector<1x8xi32> to vector<128x8xi32>
    %53 = arith.cmpi eq, %52, %0 : vector<128x8xi32>
    %cst_22 = arith.constant 1.000000e+00 : f32
    %cst_23 = arith.constant 0.000000e+00 : f32
    %54 = vector.broadcast %cst_22 : f32 to vector<128x8xf32>
    %55 = vector.broadcast %cst_23 : f32 to vector<128x8xf32>
    %56 = arith.select %53, %54, %55 : vector<128x8xi1>, vector<128x8xf32>
    %57 = arith.addf %50, %56 : vector<128x8xf32>
    %c0_24 = arith.constant 0 : index
    %c0_25 = arith.constant 0 : index
    %58 = vector.load %arg2[%c0_24, %c0_25] : memref<128x128xf32, #tpu.memory_space<vmem>>, vector<128x128xf32>
    %cst_26 = arith.constant dense<0.000000e+00> : vector<128x8xf32>
    %59 = tpu.matmul %58, %57, %cst_26 {dimension_numbers = #tpu.dot_dimension_numbers<[1], [0], [0], [1], [0, 0, 1, 1], [], []>} : vector<128x128xf32>, vector<128x8xf32>, vector<128x8xf32> -> vector<128x8xf32>
    %cst_27 = arith.constant 1.250000e-01 : f32
    %60 = vector.broadcast %cst_27 : f32 to vector<128x8xf32>
    %61 = arith.mulf %59, %60 : vector<128x8xf32>
    %c0_28 = arith.constant 0 : index
    %c0_29 = arith.constant 0 : index
    %62 = vector.load %arg3[%c0_28, %c0_29] : memref<128x128xf32, #tpu.memory_space<vmem>>, vector<128x128xf32>
    %cst_30 = arith.constant dense<0.000000e+00> : vector<128x8xf32>
    %63 = tpu.matmul %62, %61, %cst_30 {dimension_numbers = #tpu.dot_dimension_numbers<[1], [0], [0], [1], [0, 0, 1, 1], [], []>} : vector<128x128xf32>, vector<128x8xf32>, vector<128x8xf32> -> vector<128x8xf32>
    %c0_31 = arith.constant 0 : index
    %c0_32 = arith.constant 0 : index
    %64 = vector.load %arg4[%c0_31, %c0_32] : memref<128x1xf32, #tpu.memory_space<vmem>>, vector<128x1xf32>
    %65 = vector.broadcast %64 : vector<128x1xf32> to vector<128x8xf32>
    %66 = arith.addf %63, %65 : vector<128x8xf32>
    %67 = math.tanh %66 : vector<128x8xf32>
    %c0_33 = arith.constant 0 : index
    %c0_34 = arith.constant 0 : index
    %68 = vector.load %arg5[%c0_33, %c0_34] : memref<128x1xf32, #tpu.memory_space<vmem>>, vector<128x1xf32>
    %69 = vector.broadcast %68 : vector<128x1xf32> to vector<128x8xf32>
    %70 = arith.mulf %67, %69 : vector<128x8xf32>
    %cst_35 = arith.constant dense<0.000000e+00> : vector<8xf32>
    %71 = vector.multi_reduction <add>, %70, %cst_35 [0] : vector<128x8xf32> to vector<8xf32>
    %72 = vector.shape_cast %71 : vector<8xf32> to vector<1x8xf32>
    %c0_36 = arith.constant 0 : index
    %73 = memref.load %arg6[%c0_36] : memref<1xf32, #tpu.memory_space<smem>>
    %74 = vector.broadcast %73 : f32 to vector<1x8xf32>
    %75 = arith.addf %72, %74 : vector<1x8xf32>
    %76 = vector.shape_cast %75 : vector<1x8xf32> to vector<1x1x8xf32>
    %c0_37 = arith.constant 0 : index
    %c0_38 = arith.constant 0 : index
    %c0_39 = arith.constant 0 : index
    %77 = vector.load %arg7[%c0_37, %c0_38, %c0_39] : memref<1x1x8xf32, #tpu.memory_space<vmem>>, vector<1x1x8xf32>
    tpu.vector_store %arg7[%c0_37, %c0_38, %c0_39], %76 {strides = array<i32>} : memref<1x1x8xf32, #tpu.memory_space<vmem>>, vector<1x1x8xf32>,
    return
  }
  func.func @transform_0(%arg0: i32) -> (i32, i32) {
    %c0_i32 = arith.constant 0 : i32
    %c0_i32_0 = arith.constant 0 : i32
    return %c0_i32, %arg0 : i32, i32
  }
  func.func @transform_1(%arg0: i32) -> (i32, i32) {
    %c0_i32 = arith.constant 0 : i32
    %c0_i32_0 = arith.constant 0 : i32
    %c0_i32_1 = arith.constant 0 : i32
    return %c0_i32, %c0_i32_0 : i32, i32
  }
  func.func @transform_2(%arg0: i32) -> (i32, i32) {
    %c0_i32 = arith.constant 0 : i32
    %c0_i32_0 = arith.constant 0 : i32
    %c0_i32_1 = arith.constant 0 : i32
    return %c0_i32, %c0_i32_0 : i32, i32
  }
  func.func @transform_3(%arg0: i32) -> (i32, i32) {
    %c0_i32 = arith.constant 0 : i32
    %c0_i32_0 = arith.constant 0 : i32
    %c0_i32_1 = arith.constant 0 : i32
    return %c0_i32, %c0_i32_0 : i32, i32
  }
  func.func @transform_4(%arg0: i32) -> (i32, i32) {
    %c0_i32 = arith.constant 0 : i32
    %c0_i32_0 = arith.constant 0 : i32
    %c0_i32_1 = arith.constant 0 : i32
    return %c0_i32, %c0_i32_0 : i32, i32
  }
  func.func @transform_5(%arg0: i32) -> i32 {
    %c0_i32 = arith.constant 0 : i32
    %c0_i32_0 = arith.constant 0 : i32
    return %c0_i32 : i32
  }
  func.func @transform_6(%arg0: i32) -> (i32, i32, i32) {
    %c0_i32 = arith.constant 0 : i32
    %c0_i32_0 = arith.constant 0 : i32
    %c0_i32_1 = arith.constant 0 : i32
    return %arg0, %c0_i32, %c0_i32_0 : i32, i32, i32
  }
}

</mosaic_0001>

<llo_original>
// kernel: tpu_custom_call.1
$region0: #{tpu_custom_call.1}
  #allocation0 [shape = 'u32[]', space=smem, size = 0x4, offset = 0x4, fixed_abs, tag = 'smem constant byte address 0x4 - core index']
  #allocation1 [shape = 'u32[144,128]{1,0:T(1,128)}', space=vmem, size = 0x12000, scoped, tag = 'internal scratch']
  #allocation2 [shape = 'f32[1]{0:T(128)S(6)}', space=smem, size = 0x200, scoped, tag = 'scoped memory for tpu_custom_call.1']
  %s0 = inlined_call_operand.hbm [shape: s32[8,8], index: 0, kind: input, shape index: {}]
  %s1 = inlined_call_operand.vmem [shape: f32[128,128], index: 1, kind: input, shape index: {}]
  %s2 = inlined_call_operand.vmem [shape: f32[128,128], index: 2, kind: input, shape index: {}]
  %s3 = inlined_call_operand.vmem [shape: f32[128,1], index: 3, kind: input, shape index: {}]
  %s4 = inlined_call_operand.vmem [shape: f32[128,1], index: 4, kind: input, shape index: {}]
  %s5 = inlined_call_operand.<no memory space> [shape: f32[1], index: 5, kind: input, shape index: {}]
  %s6 = inlined_call_operand.hbm [shape: f32[1,1,8], index: 6, kind: output, shape index: {}]
  %s7 = sld [smem:[#allocation0]]
  $region38: #{tpu_custom_call.1} parent=0
    _
  %s9 = ssub.s32 1, %s7
  %s10 = scalar_select 0, %s9, %s7
  %11 = sst [smem:[#allocation2]] %s5
  $region1: #{tpu_custom_call.1} parent=0
    #allocation3 [shape = 'u8[4096]{0}', space=vmem, size = 0x1000, scoped, tag = 'input window, operand 0, single buffered']
    #allocation4 [shape = 's32[1]{0}', space=sflag, size = 0x4, scoped, tag = 'scoped memory for tpu_custom_call.1']
    #allocation5 [shape = 's32[1]{0}', space=sflag, size = 0x4, scoped, tag = 'scoped memory for tpu_custom_call.1']
    #allocation6 [shape = 'u8[512]{0}', space=vmem, size = 0x400, scoped, tag = 'output window, operand 0, single buffered']
    %12 = vsyncpa [#allocation4], 0
    %13 = vsyncpa [#allocation5], 0
    // Predicated region
    $region2: #{tpu_custom_call.1} parent=1 // pred_check
      _
    $region3: #{tpu_custom_call.1} parent=1 // pred_check_branch
      %15 = sbr.rel (0) target = $region5
    $region4: #{tpu_custom_call.1} parent=1 // pred_region
      %s17 = ssub.s32 128, 128
      %18 = vsyncadd [#allocation4], %s17
      %s20 = sshll.u32 [#allocation3], 4
      %s21 = int_to_ptr.vmem [resolvable:$true] %s20
      %23 = dma.hbm_to_vmem [thread:$0]  %s0, 128, %s21, [#allocation4]
    $region5: #{tpu_custom_call.1} parent=1 // pred_fallthru
      _
    // Predicated region
    $region6: #{tpu_custom_call.1} parent=1 // pred_check
      _
    $region7: #{tpu_custom_call.1} parent=1 // pred_check_branch
      %25 = sbr.rel (0) target = $region9
    $region8: #{tpu_custom_call.1} parent=1 // pred_region
      _
    $region9: #{tpu_custom_call.1} parent=1 // pred_fallthru
      _
    // Predicated region
    $region10: #{tpu_custom_call.1} parent=1 // pred_check
      _
    $region11: #{tpu_custom_call.1} parent=1 // pred_check_branch
      %27 = sbr.rel (0) target = $region13
    $region12: #{tpu_custom_call.1} parent=1 // pred_region
      _
    $region13: #{tpu_custom_call.1} parent=1 // pred_fallthru
      _
    // Predicated region
    $region14: #{tpu_custom_call.1} parent=1 // pred_check
      _
    $region15: #{tpu_custom_call.1} parent=1 // pred_check_branch
      %29 = sbr.rel (0) target = $region17
    $region16: #{tpu_custom_call.1} parent=1 // pred_region
      _
    $region17: #{tpu_custom_call.1} parent=1 // pred_fallthru
      _
    // Predicated region
    $region18: #{tpu_custom_call.1} parent=1 // pred_check
      _
    $region19: #{tpu_custom_call.1} parent=1 // pred_check_branch
      %31 = sbr.rel (0) target = $region21
    $region20: #{tpu_custom_call.1} parent=1 // pred_region
      _
    $region21: #{tpu_custom_call.1} parent=1 // pred_fallthru
      _
    // Predicated region
    $region22: #{tpu_custom_call.1} parent=1 // pred_check
      _
    $region23: #{tpu_custom_call.1} parent=1 // pred_check_branch
      %33 = sbr.rel (0) target = $region25
    $region24: #{tpu_custom_call.1} parent=1 // pred_region
      _
    $region25: #{tpu_custom_call.1} parent=1 // pred_fallthru
      _
    // Predicated region
    $region26: #{tpu_custom_call.1} parent=1 // pred_check
      _
    $region27: #{tpu_custom_call.1} parent=1 // pred_check_branch
      %35 = sbr.rel (0) target = $region29
    $region28: #{tpu_custom_call.1} parent=1 // pred_region
      %36 = dma.done [#allocation4], 128
    $region29: #{tpu_custom_call.1} parent=1 // pred_fallthru
      _
    %v37 = vlaneseq
    %v38 = vshrl.u32 %v37, 7
    %v39 = vadd.s32 %v38, 8
    %v40 = vadd.s32 %v38, 16
    %v41 = vadd.s32 %v38, 24
    %v42 = vadd.s32 %v38, 32
    %v43 = vadd.s32 %v38, 40
    %v44 = vadd.s32 %v38, 48
    %v45 = vadd.s32 %v38, 56
    %v46 = vadd.s32 %v38, 64
    %v47 = vadd.s32 %v38, 72
    %v48 = vadd.s32 %v38, 80
    %v49 = vadd.s32 %v38, 88
    %v50 = vadd.s32 %v38, 96
    %v51 = vadd.s32 %v38, 104
    %v52 = vadd.s32 %v38, 112
    %v53 = vadd.s32 %v38, 120
    %v54 = vld [vmem:[#allocation3] sm:$0x1]
    %v55 = vlaneseq
    %v56 = vshrl.u32 %v55, 7
    %v57 = vsub.s32 0, %v56
    %v58 = vrot.slane %v54, %v57
    %vm59 = vcmp.eq.s32.totalorder %v58, %v38
    %vm60 = vcmp.eq.s32.totalorder %v58, %v39
    %vm61 = vcmp.eq.s32.totalorder %v58, %v40
    %vm62 = vcmp.eq.s32.totalorder %v58, %v41
    %vm63 = vcmp.eq.s32.totalorder %v58, %v42
    %vm64 = vcmp.eq.s32.totalorder %v58, %v43
    %vm65 = vcmp.eq.s32.totalorder %v58, %v44
    %vm66 = vcmp.eq.s32.totalorder %v58, %v45
    %vm67 = vcmp.eq.s32.totalorder %v58, %v46
    %vm68 = vcmp.eq.s32.totalorder %v58, %v47
    %vm69 = vcmp.eq.s32.totalorder %v58, %v48
    %vm70 = vcmp.eq.s32.totalorder %v58, %v49
    %vm71 = vcmp.eq.s32.totalorder %v58, %v50
    %vm72 = vcmp.eq.s32.totalorder %v58, %v51
    %vm73 = vcmp.eq.s32.totalorder %v58, %v52
    %vm74 = vcmp.eq.s32.totalorder %v58, %v53
    %v75 = vsel %vm59, 1.0, 0.0
    %v76 = vsel %vm60, 1.0, 0.0
    %v77 = vsel %vm61, 1.0, 0.0
    %v78 = vsel %vm62, 1.0, 0.0
    %v79 = vsel %vm63, 1.0, 0.0
    %v80 = vsel %vm64, 1.0, 0.0
    %v81 = vsel %vm65, 1.0, 0.0
    %v82 = vsel %vm66, 1.0, 0.0
    %v83 = vsel %vm67, 1.0, 0.0
    %v84 = vsel %vm68, 1.0, 0.0
    %v85 = vsel %vm69, 1.0, 0.0
    %v86 = vsel %vm70, 1.0, 0.0
    %v87 = vsel %vm71, 1.0, 0.0
    %v88 = vsel %vm72, 1.0, 0.0
    %v89 = vsel %vm73, 1.0, 0.0
    %v90 = vsel %vm74, 1.0, 0.0
    %v91 = vadd.f32 %v75, 0.0
    %v92 = vadd.f32 %v76, 0.0
    %v93 = vadd.f32 %v77, 0.0
    %v94 = vadd.f32 %v78, 0.0
    %v95 = vadd.f32 %v79, 0.0
    %v96 = vadd.f32 %v80, 0.0
    %v97 = vadd.f32 %v81, 0.0
    %v98 = vadd.f32 %v82, 0.0
    %v99 = vadd.f32 %v83, 0.0
    %v100 = vadd.f32 %v84, 0.0
    %v101 = vadd.f32 %v85, 0.0
    %v102 = vadd.f32 %v86, 0.0
    %v103 = vadd.f32 %v87, 0.0
    %v104 = vadd.f32 %v88, 0.0
    %v105 = vadd.f32 %v89, 0.0
    %v106 = vadd.f32 %v90, 0.0
    %v107 = vld [vmem:[#allocation3 + $0x1] sm:$0x1]
    %v108 = vlaneseq
    %v109 = vshrl.u32 %v108, 7
    %v110 = vsub.s32 0, %v109
    %v111 = vrot.slane %v107, %v110
    %vm112 = vcmp.eq.s32.totalorder %v111, %v38
    %vm113 = vcmp.eq.s32.totalorder %v111, %v39
    %vm114 = vcmp.eq.s32.totalorder %v111, %v40
    %vm115 = vcmp.eq.s32.totalorder %v111, %v41
    %vm116 = vcmp.eq.s32.totalorder %v111, %v42
    %vm117 = vcmp.eq.s32.totalorder %v111, %v43
    %vm118 = vcmp.eq.s32.totalorder %v111, %v44
    %vm119 = vcmp.eq.s32.totalorder %v111, %v45
    %vm120 = vcmp.eq.s32.totalorder %v111, %v46
    %vm121 = vcmp.eq.s32.totalorder %v111, %v47
    %vm122 = vcmp.eq.s32.totalorder %v111, %v48
    %vm123 = vcmp.eq.s32.totalorder %v111, %v49
    %vm124 = vcmp.eq.s32.totalorder %v111, %v50
    %vm125 = vcmp.eq.s32.totalorder %v111, %v51
    %vm126 = vcmp.eq.s32.totalorder %v111, %v52
    %vm127 = vcmp.eq.s32.totalorder %v111, %v53
    %v128 = vsel %vm112, 1.0, 0.0
    %v129 = vsel %vm113, 1.0, 0.0
    %v130 = vsel %vm114, 1.0, 0.0
    %v131 = vsel %vm115, 1.0, 0.0
    %v132 = vsel %vm116, 1.0, 0.0
    %v133 = vsel %vm117, 1.0, 0.0
    %v134 = vsel %vm118, 1.0, 0.0
    %v135 = vsel %vm119, 1.0, 0.0
    %v136 = vsel %vm120, 1.0, 0.0
    %v137 = vsel %vm121, 1.0, 0.0
    %v138 = vsel %vm122, 1.0, 0.0
    %v139 = vsel %vm123, 1.0, 0.0
    %v140 = vsel %vm124, 1.0, 0.0
    %v141 = vsel %vm125, 1.0, 0.0
    %v142 = vsel %vm126, 1.0, 0.0
    %v143 = vsel %vm127, 1.0, 0.0
    %v144 = vadd.f32 %v91, %v128
    %v145 = vadd.f32 %v92, %v129
    %v146 = vadd.f32 %v93, %v130
    %v147 = vadd.f32 %v94, %v131
    %v148 = vadd.f32 %v95, %v132
    %v149 = vadd.f32 %v96, %v133
    %v150 = vadd.f32 %v97, %v134
    %v151 = vadd.f32 %v98, %v135
    %v152 = vadd.f32 %v99, %v136
    %v153 = vadd.f32 %v100, %v137
    %v154 = vadd.f32 %v101, %v138
    %v155 = vadd.f32 %v102, %v139
    %v156 = vadd.f32 %v103, %v140
    %v157 = vadd.f32 %v104, %v141
    %v158 = vadd.f32 %v105, %v142
    %v159 = vadd.f32 %v106, %v143
    %v160 = vld [vmem:[#allocation3 + $0x2] sm:$0x1]
    %v161 = vlaneseq
    %v162 = vshrl.u32 %v161, 7
    %v163 = vsub.s32 0, %v162
    %v164 = vrot.slane %v160, %v163
    %vm165 = vcmp.eq.s32.totalorder %v164, %v38
    %vm166 = vcmp.eq.s32.totalorder %v164, %v39
    %vm167 = vcmp.eq.s32.totalorder %v164, %v40
    %vm168 = vcmp.eq.s32.totalorder %v164, %v41
    %vm169 = vcmp.eq.s32.totalorder %v164, %v42
    %vm170 = vcmp.eq.s32.totalorder %v164, %v43
    %vm171 = vcmp.eq.s32.totalorder %v164, %v44
    %vm172 = vcmp.eq.s32.totalorder %v164, %v45
    %vm173 = vcmp.eq.s32.totalorder %v164, %v46
    %vm174 = vcmp.eq.s32.totalorder %v164, %v47
    %vm175 = vcmp.eq.s32.totalorder %v164, %v48
    %vm176 = vcmp.eq.s32.totalorder %v164, %v49
    %vm177 = vcmp.eq.s32.totalorder %v164, %v50
    %vm178 = vcmp.eq.s32.totalorder %v164, %v51
    %vm179 = vcmp.eq.s32.totalorder %v164, %v52
    %vm180 = vcmp.eq.s32.totalorder %v164, %v53
    %v181 = vsel %vm165, 1.0, 0.0
    %v182 = vsel %vm166, 1.0, 0.0
    %v183 = vsel %vm167, 1.0, 0.0
    %v184 = vsel %vm168, 1.0, 0.0
    %v185 = vsel %vm169, 1.0, 0.0
    %v186 = vsel %vm170, 1.0, 0.0
    %v187 = vsel %vm171, 1.0, 0.0
    %v188 = vsel %vm172, 1.0, 0.0
    %v189 = vsel %vm173, 1.0, 0.0
    %v190 = vsel %vm174, 1.0, 0.0
    %v191 = vsel %vm175, 1.0, 0.0
    %v192 = vsel %vm176, 1.0, 0.0
    %v193 = vsel %vm177, 1.0, 0.0
    %v194 = vsel %vm178, 1.0, 0.0
    %v195 = vsel %vm179, 1.0, 0.0
    %v196 = vsel %vm180, 1.0, 0.0
    %v197 = vadd.f32 %v144, %v181
    %v198 = vadd.f32 %v145, %v182
    %v199 = vadd.f32 %v146, %v183
    %v200 = vadd.f32 %v147, %v184
    %v201 = vadd.f32 %v148, %v185
    %v202 = vadd.f32 %v149, %v186
    %v203 = vadd.f32 %v150, %v187
    %v204 = vadd.f32 %v151, %v188
    %v205 = vadd.f32 %v152, %v189
    %v206 = vadd.f32 %v153, %v190
    %v207 = vadd.f32 %v154, %v191
    %v208 = vadd.f32 %v155, %v192
    %v209 = vadd.f32 %v156, %v193
    %v210 = vadd.f32 %v157, %v194
    %v211 = vadd.f32 %v158, %v195
    %v212 = vadd.f32 %v159, %v196
    %v213 = vld [vmem:[#allocation3 + $0x3] sm:$0x1]
    %v214 = vlaneseq
    %v215 = vshrl.u32 %v214, 7
    %v216 = vsub.s32 0, %v215
    %v217 = vrot.slane %v213, %v216
    %vm218 = vcmp.eq.s32.totalorder %v217, %v38
    %vm219 = vcmp.eq.s32.totalorder %v217, %v39
    %vm220 = vcmp.eq.s32.totalorder %v217, %v40
    %vm221 = vcmp.eq.s32.totalorder %v217, %v41
    %vm222 = vcmp.eq.s32.totalorder %v217, %v42
    %vm223 = vcmp.eq.s32.totalorder %v217, %v43
    %vm224 = vcmp.eq.s32.totalorder %v217, %v44
    %vm225 = vcmp.eq.s32.totalorder %v217, %v45
    %vm226 = vcmp.eq.s32.totalorder %v217, %v46
    %vm227 = vcmp.eq.s32.totalorder %v217, %v47
    %vm228 = vcmp.eq.s32.totalorder %v217, %v48
    %vm229 = vcmp.eq.s32.totalorder %v217, %v49
    %vm230 = vcmp.eq.s32.totalorder %v217, %v50
    %vm231 = vcmp.eq.s32.totalorder %v217, %v51
    %vm232 = vcmp.eq.s32.totalorder %v217, %v52
    %vm233 = vcmp.eq.s32.totalorder %v217, %v53
    %v234 = vsel %vm218, 1.0, 0.0
    %v235 = vsel %vm219, 1.0, 0.0
    %v236 = vsel %vm220, 1.0, 0.0
    %v237 = vsel %vm221, 1.0, 0.0
    %v238 = vsel %vm222, 1.0, 0.0
    %v239 = vsel %vm223, 1.0, 0.0
    %v240 = vsel %vm224, 1.0, 0.0
    %v241 = vsel %vm225, 1.0, 0.0
    %v242 = vsel %vm226, 1.0, 0.0
    %v243 = vsel %vm227, 1.0, 0.0
    %v244 = vsel %vm228, 1.0, 0.0
    %v245 = vsel %vm229, 1.0, 0.0
    %v246 = vsel %vm230, 1.0, 0.0
    %v247 = vsel %vm231, 1.0, 0.0
    %v248 = vsel %vm232, 1.0, 0.0
    %v249 = vsel %vm233, 1.0, 0.0
    %v250 = vadd.f32 %v197, %v234
    %v251 = vadd.f32 %v198, %v235
    %v252 = vadd.f32 %v199, %v236
    %v253 = vadd.f32 %v200, %v237
    %v254 = vadd.f32 %v201, %v238
    %v255 = vadd.f32 %v202, %v239
    %v256 = vadd.f32 %v203, %v240
    %v257 = vadd.f32 %v204, %v241
    %v258 = vadd.f32 %v205, %v242
    %v259 = vadd.f32 %v206, %v243
    %v260 = vadd.f32 %v207, %v244
    %v261 = vadd.f32 %v208, %v245
    %v262 = vadd.f32 %v209, %v246
    %v263 = vadd.f32 %v210, %v247
    %v264 = vadd.f32 %v211, %v248
    %v265 = vadd.f32 %v212, %v249
    %v266 = vld [vmem:[#allocation3 + $0x4] sm:$0x1]
    %v267 = vlaneseq
    %v268 = vshrl.u32 %v267, 7
    %v269 = vsub.s32 0, %v268
    %v270 = vrot.slane %v266, %v269
    %vm271 = vcmp.eq.s32.totalorder %v270, %v38
    %vm272 = vcmp.eq.s32.totalorder %v270, %v39
    %vm273 = vcmp.eq.s32.totalorder %v270, %v40
    %vm274 = vcmp.eq.s32.totalorder %v270, %v41
    %vm275 = vcmp.eq.s32.totalorder %v270, %v42
    %vm276 = vcmp.eq.s32.totalorder %v270, %v43
    %vm277 = vcmp.eq.s32.totalorder %v270, %v44
    %vm278 = vcmp.eq.s32.totalorder %v270, %v45
    %vm279 = vcmp.eq.s32.totalorder %v270, %v46
    %vm280 = vcmp.eq.s32.totalorder %v270, %v47
    %vm281 = vcmp.eq.s32.totalorder %v270, %v48
    %vm282 = vcmp.eq.s32.totalorder %v270, %v49
    %vm283 = vcmp.eq.s32.totalorder %v270, %v50
    %vm284 = vcmp.eq.s32.totalorder %v270, %v51
    %vm285 = vcmp.eq.s32.totalorder %v270, %v52
    %vm286 = vcmp.eq.s32.totalorder %v270, %v53
    %v287 = vsel %vm271, 1.0, 0.0
    %v288 = vsel %vm272, 1.0, 0.0
    %v289 = vsel %vm273, 1.0, 0.0
    %v290 = vsel %vm274, 1.0, 0.0
    %v291 = vsel %vm275, 1.0, 0.0
    %v292 = vsel %vm276, 1.0, 0.0
    %v293 = vsel %vm277, 1.0, 0.0
    %v294 = vsel %vm278, 1.0, 0.0
    %v295 = vsel %vm279, 1.0, 0.0
    %v296 = vsel %vm280, 1.0, 0.0
    %v297 = vsel %vm281, 1.0, 0.0
    %v298 = vsel %vm282, 1.0, 0.0
    %v299 = vsel %vm283, 1.0, 0.0
    %v300 = vsel %vm284, 1.0, 0.0
    %v301 = vsel %vm285, 1.0, 0.0
    %v302 = vsel %vm286, 1.0, 0.0
    %v303 = vadd.f32 %v250, %v287
    %v304 = vadd.f32 %v251, %v288
    %v305 = vadd.f32 %v252, %v289
    %v306 = vadd.f32 %v253, %v290
    %v307 = vadd.f32 %v254, %v291
    %v308 = vadd.f32 %v255, %v292
    %v309 = vadd.f32 %v256, %v293
    %v310 = vadd.f32 %v257, %v294
    %v311 = vadd.f32 %v258, %v295
    %v312 = vadd.f32 %v259, %v296
    %v313 = vadd.f32 %v260, %v297
    %v314 = vadd.f32 %v261, %v298
    %v315 = vadd.f32 %v262, %v299
    %v316 = vadd.f32 %v263, %v300
    %v317 = vadd.f32 %v264, %v301
    %v318 = vadd.f32 %v265, %v302
    %v319 = vld [vmem:[#allocation3 + $0x5] sm:$0x1]
    %v320 = vlaneseq
    %v321 = vshrl.u32 %v320, 7
    %v322 = vsub.s32 0, %v321
    %v323 = vrot.slane %v319, %v322
    %vm324 = vcmp.eq.s32.totalorder %v323, %v38
    %vm325 = vcmp.eq.s32.totalorder %v323, %v39
    %vm326 = vcmp.eq.s32.totalorder %v323, %v40
    %vm327 = vcmp.eq.s32.totalorder %v323, %v41
    %vm328 = vcmp.eq.s32.totalorder %v323, %v42
    %vm329 = vcmp.eq.s32.totalorder %v323, %v43
    %vm330 = vcmp.eq.s32.totalorder %v323, %v44
    %vm331 = vcmp.eq.s32.totalorder %v323, %v45
    %vm332 = vcmp.eq.s32.totalorder %v323, %v46
    %vm333 = vcmp.eq.s32.totalorder %v323, %v47
    %vm334 = vcmp.eq.s32.totalorder %v323, %v48
    %vm335 = vcmp.eq.s32.totalorder %v323, %v49
    %vm336 = vcmp.eq.s32.totalorder %v323, %v50
    %vm337 = vcmp.eq.s32.totalorder %v323, %v51
    %vm338 = vcmp.eq.s32.totalorder %v323, %v52
    %vm339 = vcmp.eq.s32.totalorder %v323, %v53
    %v340 = vsel %vm324, 1.0, 0.0
    %v341 = vsel %vm325, 1.0, 0.0
    %v342 = vsel %vm326, 1.0, 0.0
    %v343 = vsel %vm327, 1.0, 0.0
    %v344 = vsel %vm328, 1.0, 0.0
    %v345 = vsel %vm329, 1.0, 0.0
    %v346 = vsel %vm330, 1.0, 0.0
    %v347 = vsel %vm331, 1.0, 0.0
    %v348 = vsel %vm332, 1.0, 0.0
    %v349 = vsel %vm333, 1.0, 0.0
    %v350 = vsel %vm334, 1.0, 0.0
    %v351 = vsel %vm335, 1.0, 0.0
    %v352 = vsel %vm336, 1.0, 0.0
    %v353 = vsel %vm337, 1.0, 0.0
    %v354 = vsel %vm338, 1.0, 0.0
    %v355 = vsel %vm339, 1.0, 0.0
    %v356 = vadd.f32 %v303, %v340
    %v357 = vadd.f32 %v304, %v341
    %v358 = vadd.f32 %v305, %v342
    %v359 = vadd.f32 %v306, %v343
    %v360 = vadd.f32 %v307, %v344
    %v361 = vadd.f32 %v308, %v345
    %v362 = vadd.f32 %v309, %v346
    %v363 = vadd.f32 %v310, %v347
    %v364 = vadd.f32 %v311, %v348
    %v365 = vadd.f32 %v312, %v349
    %v366 = vadd.f32 %v313, %v350
    %v367 = vadd.f32 %v314, %v351
    %v368 = vadd.f32 %v315, %v352
    %v369 = vadd.f32 %v316, %v353
    %v370 = vadd.f32 %v317, %v354
    %v371 = vadd.f32 %v318, %v355
    %v372 = vld [vmem:[#allocation3 + $0x6] sm:$0x1]
    %v373 = vlaneseq
    %v374 = vshrl.u32 %v373, 7
    %v375 = vsub.s32 0, %v374
    %v376 = vrot.slane %v372, %v375
    %vm377 = vcmp.eq.s32.totalorder %v376, %v38
    %vm378 = vcmp.eq.s32.totalorder %v376, %v39
    %vm379 = vcmp.eq.s32.totalorder %v376, %v40
    %vm380 = vcmp.eq.s32.totalorder %v376, %v41
    %vm381 = vcmp.eq.s32.totalorder %v376, %v42
    %vm382 = vcmp.eq.s32.totalorder %v376, %v43
    %vm383 = vcmp.eq.s32.totalorder %v376, %v44
    %vm384 = vcmp.eq.s32.totalorder %v376, %v45
    %vm385 = vcmp.eq.s32.totalorder %v376, %v46
    %vm386 = vcmp.eq.s32.totalorder %v376, %v47
    %vm387 = vcmp.eq.s32.totalorder %v376, %v48
    %vm388 = vcmp.eq.s32.totalorder %v376, %v49
    %vm389 = vcmp.eq.s32.totalorder %v376, %v50
    %vm390 = vcmp.eq.s32.totalorder %v376, %v51
    %vm391 = vcmp.eq.s32.totalorder %v376, %v52
    %vm392 = vcmp.eq.s32.totalorder %v376, %v53
    %v393 = vsel %vm377, 1.0, 0.0
    %v394 = vsel %vm378, 1.0, 0.0
    %v395 = vsel %vm379, 1.0, 0.0
    %v396 = vsel %vm380, 1.0, 0.0
    %v397 = vsel %vm381, 1.0, 0.0
    %v398 = vsel %vm382, 1.0, 0.0
    %v399 = vsel %vm383, 1.0, 0.0
    %v400 = vsel %vm384, 1.0, 0.0
    %v401 = vsel %vm385, 1.0, 0.0
    %v402 = vsel %vm386, 1.0, 0.0
    %v403 = vsel %vm387, 1.0, 0.0
    %v404 = vsel %vm388, 1.0, 0.0
    %v405 = vsel %vm389, 1.0, 0.0
    %v406 = vsel %vm390, 1.0, 0.0
    %v407 = vsel %vm391, 1.0, 0.0
    %v408 = vsel %vm392, 1.0, 0.0
    %v409 = vadd.f32 %v356, %v393
    %v410 = vadd.f32 %v357, %v394
    %v411 = vadd.f32 %v358, %v395
    %v412 = vadd.f32 %v359, %v396
    %v413 = vadd.f32 %v360, %v397
    %v414 = vadd.f32 %v361, %v398
    %v415 = vadd.f32 %v362, %v399
    %v416 = vadd.f32 %v363, %v400
    %v417 = vadd.f32 %v364, %v401
    %v418 = vadd.f32 %v365, %v402
    %v419 = vadd.f32 %v366, %v403
    %v420 = vadd.f32 %v367, %v404
    %v421 = vadd.f32 %v368, %v405
    %v422 = vadd.f32 %v369, %v406
    %v423 = vadd.f32 %v370, %v407
    %v424 = vadd.f32 %v371, %v408
    %v425 = vld [vmem:[#allocation3 + $0x7] sm:$0x1]
    %v426 = vlaneseq
    %v427 = vshrl.u32 %v426, 7
    %v428 = vsub.s32 0, %v427
    %v429 = vrot.slane %v425, %v428
    %vm430 = vcmp.eq.s32.totalorder %v429, %v38
    %vm431 = vcmp.eq.s32.totalorder %v429, %v39
    %vm432 = vcmp.eq.s32.totalorder %v429, %v40
    %vm433 = vcmp.eq.s32.totalorder %v429, %v41
    %vm434 = vcmp.eq.s32.totalorder %v429, %v42
    %vm435 = vcmp.eq.s32.totalorder %v429, %v43
    %vm436 = vcmp.eq.s32.totalorder %v429, %v44
    %vm437 = vcmp.eq.s32.totalorder %v429, %v45
    %vm438 = vcmp.eq.s32.totalorder %v429, %v46
    %vm439 = vcmp.eq.s32.totalorder %v429, %v47
    %vm440 = vcmp.eq.s32.totalorder %v429, %v48
    %vm441 = vcmp.eq.s32.totalorder %v429, %v49
    %vm442 = vcmp.eq.s32.totalorder %v429, %v50
    %vm443 = vcmp.eq.s32.totalorder %v429, %v51
    %vm444 = vcmp.eq.s32.totalorder %v429, %v52
    %vm445 = vcmp.eq.s32.totalorder %v429, %v53
    %v446 = vsel %vm430, 1.0, 0.0
    %v447 = vsel %vm431, 1.0, 0.0
    %v448 = vsel %vm432, 1.0, 0.0
    %v449 = vsel %vm433, 1.0, 0.0
    %v450 = vsel %vm434, 1.0, 0.0
    %v451 = vsel %vm435, 1.0, 0.0
    %v452 = vsel %vm436, 1.0, 0.0
    %v453 = vsel %vm437, 1.0, 0.0
    %v454 = vsel %vm438, 1.0, 0.0
    %v455 = vsel %vm439, 1.0, 0.0
    %v456 = vsel %vm440, 1.0, 0.0
    %v457 = vsel %vm441, 1.0, 0.0
    %v458 = vsel %vm442, 1.0, 0.0
    %v459 = vsel %vm443, 1.0, 0.0
    %v460 = vsel %vm444, 1.0, 0.0
    %v461 = vsel %vm445, 1.0, 0.0
    %v462 = vadd.f32 %v409, %v446
    %v463 = vadd.f32 %v410, %v447
    %v464 = vadd.f32 %v411, %v448
    %v465 = vadd.f32 %v412, %v449
    %v466 = vadd.f32 %v413, %v450
    %v467 = vadd.f32 %v414, %v451
    %v468 = vadd.f32 %v415, %v452
    %v469 = vadd.f32 %v416, %v453
    %v470 = vadd.f32 %v417, %v454
    %v471 = vadd.f32 %v418, %v455
    %v472 = vadd.f32 %v419, %v456
    %v473 = vadd.f32 %v420, %v457
    %v474 = vadd.f32 %v421, %v458
    %v475 = vadd.f32 %v422, %v459
    %v476 = vadd.f32 %v423, %v460
    %v477 = vadd.f32 %v424, %v461
    %v478 = vld [vmem:[%s1] sm:$0xff]
    %v479 = vld [vmem:[%s1 + $0x8] sm:$0xff]
    %v480 = vld [vmem:[%s1 + $0x10] sm:$0xff]
    %v481 = vld [vmem:[%s1 + $0x18] sm:$0xff]
    %v482 = vld [vmem:[%s1 + $0x20] sm:$0xff]
    %v483 = vld [vmem:[%s1 + $0x28] sm:$0xff]
    %v484 = vld [vmem:[%s1 + $0x30] sm:$0xff]
    %v485 = vld [vmem:[%s1 + $0x38] sm:$0xff]
    %v486 = vld [vmem:[%s1 + $0x40] sm:$0xff]
    %v487 = vld [vmem:[%s1 + $0x48] sm:$0xff]
    %v488 = vld [vmem:[%s1 + $0x50] sm:$0xff]
    %v489 = vld [vmem:[%s1 + $0x58] sm:$0xff]
    %v490 = vld [vmem:[%s1 + $0x60] sm:$0xff]
    %v491 = vld [vmem:[%s1 + $0x68] sm:$0xff]
    %v492 = vld [vmem:[%s1 + $0x70] sm:$0xff]
    %v493 = vld [vmem:[%s1 + $0x78] sm:$0xff]
    %494 = vmatprep.subr.mxu0 0.0
    %495 = vmatpush1.msra.mxu0 %v462
    %496 = vmatprep.subr.mxu0 0.0
    %497 = vmatpush1.msra.mxu0 %v463
    %498 = vmatprep.subr.mxu0 0.0
    %499 = vmatpush1.msra.mxu0 %v464
    %500 = vmatprep.subr.mxu0 0.0
    %501 = vmatpush1.msra.mxu0 %v465
    %502 = vmatprep.subr.mxu0 0.0
    %503 = vmatpush1.msra.mxu0 %v466
    %504 = vmatprep.subr.mxu0 0.0
    %505 = vmatpush1.msra.mxu0 %v467
    %506 = vmatprep.subr.mxu0 0.0
    %507 = vmatpush1.msra.mxu0 %v468
    %508 = vmatprep.subr.mxu0 0.0
    %509 = vmatpush1.msra.mxu0 %v469
    %510 = vmatprep.subr.mxu0 0.0
    %511 = vmatpush1.msra.mxu0 %v470
    %512 = vmatprep.subr.mxu0 0.0
    %513 = vmatpush1.msra.mxu0 %v471
    %514 = vmatprep.subr.mxu0 0.0
    %515 = vmatpush1.msra.mxu0 %v472
    %516 = vmatprep.subr.mxu0 0.0
    %517 = vmatpush1.msra.mxu0 %v473
    %518 = vmatprep.subr.mxu0 0.0
    %519 = vmatpush1.msra.mxu0 %v474
    %520 = vmatprep.subr.mxu0 0.0
    %521 = vmatpush1.msra.mxu0 %v475
    %522 = vmatprep.subr.mxu0 0.0
    %523 = vmatpush1.msra.mxu0 %v476
    %524 = vmatprep.subr.mxu0 0.0
    %525 = vmatpush1.msra.mxu0 %v477
    %526 = vmatprep.subr.mxu0 0.0
    %527 = vmatpush1.msra.mxu0 0.0
    %528 = vmatprep.subr.mxu0 0.0
    %529 = vmatpush1.msra.mxu0 0.0
    %530 = vmatprep.subr.mxu0 0.0
    %531 = vmatpush1.msra.mxu0 0.0
    %532 = vmatprep.subr.mxu0 0.0
    %533 = vmatpush1.msra.mxu0 0.0
    %534 = vmatprep.subr.mxu0 0.0
    %535 = vmatpush1.msra.mxu0 0.0
    %536 = vmatprep.subr.mxu0 0.0
    %537 = vmatpush1.msra.mxu0 0.0
    %538 = vmatprep.subr.mxu0 0.0
    %539 = vmatpush1.msra.mxu0 0.0
    %540 = vmatprep.subr.mxu0 0.0
    %541 = vmatpush1.msra.mxu0 0.0
    %542 = vmatprep.subr.mxu0 0.0
    %543 = vmatpush1.msra.mxu0 0.0
    %544 = vmatprep.subr.mxu0 0.0
    %545 = vmatpush1.msra.mxu0 0.0
    %546 = vmatprep.subr.mxu0 0.0
    %547 = vmatpush1.msra.mxu0 0.0
    %548 = vmatprep.subr.mxu0 0.0
    %549 = vmatpush1.msra.mxu0 0.0
    %550 = vmatprep.subr.mxu0 0.0
    %551 = vmatpush1.msra.mxu0 0.0
    %552 = vmatprep.subr.mxu0 0.0
    %553 = vmatpush1.msra.mxu0 0.0
    %554 = vmatprep.subr.mxu0 0.0
    %555 = vmatpush1.msra.mxu0 0.0
    %556 = vmatprep.subr.mxu0 0.0
    %557 = vmatpush1.msra.mxu0 0.0
    %558 = vmatprep.mubr.f32.mxu0 0.0
    %559 = vmatmul.mubr.f32.gmra.mrb[0].mxu0 %v478
    %v560 = vpop.f32.mrb[0].mxu0
    %v561 = vadd.f32 0.0, %v560
    %v562 = vpop.f32.mrb[0].mxu0
    %563 = vmatprep.mubr.f32.mxu0 0.0
    %564 = vmatmul.mubr.f32.gmra.mrb[0].mxu0 %v479
    %v565 = vpop.f32.mrb[0].mxu0
    %v566 = vadd.f32 0.0, %v565
    %v567 = vpop.f32.mrb[0].mxu0
    %568 = vmatprep.mubr.f32.mxu0 0.0
    %569 = vmatmul.mubr.f32.gmra.mrb[0].mxu0 %v480
    %v570 = vpop.f32.mrb[0].mxu0
    %v571 = vadd.f32 0.0, %v570
    %v572 = vpop.f32.mrb[0].mxu0
    %573 = vmatprep.mubr.f32.mxu0 0.0
    %574 = vmatmul.mubr.f32.gmra.mrb[0].mxu0 %v481
    %v575 = vpop.f32.mrb[0].mxu0
    %v576 = vadd.f32 0.0, %v575
    %v577 = vpop.f32.mrb[0].mxu0
    %578 = vmatprep.mubr.f32.mxu0 0.0
    %579 = vmatmul.mubr.f32.gmra.mrb[0].mxu0 %v482
    %v580 = vpop.f32.mrb[0].mxu0
    %v581 = vadd.f32 0.0, %v580
    %v582 = vpop.f32.mrb[0].mxu0
    %583 = vmatprep.mubr.f32.mxu0 0.0
    %584 = vmatmul.mubr.f32.gmra.mrb[0].mxu0 %v483
    %v585 = vpop.f32.mrb[0].mxu0
    %v586 = vadd.f32 0.0, %v585
    %v587 = vpop.f32.mrb[0].mxu0
    %588 = vmatprep.mubr.f32.mxu0 0.0
    %589 = vmatmul.mubr.f32.gmra.mrb[0].mxu0 %v484
    %v590 = vpop.f32.mrb[0].mxu0
    %v591 = vadd.f32 0.0, %v590
    %v592 = vpop.f32.mrb[0].mxu0
    %593 = vmatprep.mubr.f32.mxu0 0.0
    %594 = vmatmul.mubr.f32.gmra.mrb[0].mxu0 %v485
    %v595 = vpop.f32.mrb[0].mxu0
    %v596 = vadd.f32 0.0, %v595
    %v597 = vpop.f32.mrb[0].mxu0
    %598 = vmatprep.mubr.f32.mxu0 0.0
    %599 = vmatmul.mubr.f32.gmra.mrb[0].mxu0 %v486
    %v600 = vpop.f32.mrb[0].mxu0
    %v601 = vadd.f32 0.0, %v600
    %v602 = vpop.f32.mrb[0].mxu0
    %603 = vmatprep.mubr.f32.mxu0 0.0
    %604 = vmatmul.mubr.f32.gmra.mrb[0].mxu0 %v487
    %v605 = vpop.f32.mrb[0].mxu0
    %v606 = vadd.f32 0.0, %v605
    %v607 = vpop.f32.mrb[0].mxu0
    %608 = vmatprep.mubr.f32.mxu0 0.0
    %609 = vmatmul.mubr.f32.gmra.mrb[0].mxu0 %v488
    %v610 = vpop.f32.mrb[0].mxu0
    %v611 = vadd.f32 0.0, %v610
    %v612 = vpop.f32.mrb[0].mxu0
    %613 = vmatprep.mubr.f32.mxu0 0.0
    %614 = vmatmul.mubr.f32.gmra.mrb[0].mxu0 %v489
    %v615 = vpop.f32.mrb[0].mxu0
    %v616 = vadd.f32 0.0, %v615
    %v617 = vpop.f32.mrb[0].mxu0
    %618 = vmatprep.mubr.f32.mxu0 0.0
    %619 = vmatmul.mubr.f32.gmra.mrb[0].mxu0 %v490
    %v620 = vpop.f32.mrb[0].mxu0
    %v621 = vadd.f32 0.0, %v620
    %v622 = vpop.f32.mrb[0].mxu0
    %623 = vmatprep.mubr.f32.mxu0 0.0
    %624 = vmatmul.mubr.f32.gmra.mrb[0].mxu0 %v491
    %v625 = vpop.f32.mrb[0].mxu0
    %v626 = vadd.f32 0.0, %v625
    %v627 = vpop.f32.mrb[0].mxu0
    %628 = vmatprep.mubr.f32.mxu0 0.0
    %629 = vmatmul.mubr.f32.gmra.mrb[0].mxu0 %v492
    %v630 = vpop.f32.mrb[0].mxu0
    %v631 = vadd.f32 0.0, %v630
    %v632 = vpop.f32.mrb[0].mxu0
    %633 = vmatprep.mubr.f32.mxu0 0.0
    %634 = vmatmul.mubr.f32.gmra.mrb[0].mxu0 %v493
    %v635 = vpop.f32.mrb[0].mxu0
    %v636 = vadd.f32 0.0, %v635
    %v637 = vpop.f32.mrb[0].mxu0
    %638 = vdwg.mxu0
    %v639 = vmul.f32 %v561, 0.125
    %v640 = vmul.f32 %v566, 0.125
    %v641 = vmul.f32 %v571, 0.125
    %v642 = vmul.f32 %v576, 0.125
    %v643 = vmul.f32 %v581, 0.125
    %v644 = vmul.f32 %v586, 0.125
    %v645 = vmul.f32 %v591, 0.125
    %v646 = vmul.f32 %v596, 0.125
    %v647 = vmul.f32 %v601, 0.125
    %v648 = vmul.f32 %v606, 0.125
    %v649 = vmul.f32 %v611, 0.125
    %v650 = vmul.f32 %v616, 0.125
    %v651 = vmul.f32 %v621, 0.125
    %v652 = vmul.f32 %v626, 0.125
    %v653 = vmul.f32 %v631, 0.125
    %v654 = vmul.f32 %v636, 0.125
    %v655 = vld [vmem:[%s2] sm:$0xff]
    %v656 = vld [vmem:[%s2 + $0x8] sm:$0xff]
    %v657 = vld [vmem:[%s2 + $0x10] sm:$0xff]
    %v658 = vld [vmem:[%s2 + $0x18] sm:$0xff]
    %v659 = vld [vmem:[%s2 + $0x20] sm:$0xff]
    %v660 = vld [vmem:[%s2 + $0x28] sm:$0xff]
    %v661 = vld [vmem:[%s2 + $0x30] sm:$0xff]
    %v662 = vld [vmem:[%s2 + $0x38] sm:$0xff]
    %v663 = vld [vmem:[%s2 + $0x40] sm:$0xff]
    %v664 = vld [vmem:[%s2 + $0x48] sm:$0xff]
    %v665 = vld [vmem:[%s2 + $0x50] sm:$0xff]
    %v666 = vld [vmem:[%s2 + $0x58] sm:$0xff]
    %v667 = vld [vmem:[%s2 + $0x60] sm:$0xff]
    %v668 = vld [vmem:[%s2 + $0x68] sm:$0xff]
    %v669 = vld [vmem:[%s2 + $0x70] sm:$0xff]
    %v670 = vld [vmem:[%s2 + $0x78] sm:$0xff]
    %v671 = vld [vmem:[%s3] sm:$0xff]
    %v672 = vld [vmem:[%s3 + $0x8] sm:$0xff]
    %v673 = vld [vmem:[%s3 + $0x10] sm:$0xff]
    %v674 = vld [vmem:[%s3 + $0x18] sm:$0xff]
    %v675 = vld [vmem:[%s3 + $0x20] sm:$0xff]
    %v676 = vld [vmem:[%s3 + $0x28] sm:$0xff]
    %v677 = vld [vmem:[%s3 + $0x30] sm:$0xff]
    %v678 = vld [vmem:[%s3 + $0x38] sm:$0xff]
    %v679 = vld [vmem:[%s3 + $0x40] sm:$0xff]
    %v680 = vld [vmem:[%s3 + $0x48] sm:$0xff]
    %v681 = vld [vmem:[%s3 + $0x50] sm:$0xff]
    %v682 = vld [vmem:[%s3 + $0x58] sm:$0xff]
    %v683 = vld [vmem:[%s3 + $0x60] sm:$0xff]
    %v684 = vld [vmem:[%s3 + $0x68] sm:$0xff]
    %v685 = vld [vmem:[%s3 + $0x70] sm:$0xff]
    %v686 = vld [vmem:[%s3 + $0x78] sm:$0xff]
    %688 = vset.pattern.permute.xlu0 0
    %689 = vperm.xlu0 %688, %v671
    %v690 = vpop.permute.xlu0 %689
    %693 = vset.pattern.permute.xlu0 0
    %694 = vperm.xlu0 %693, %v672
    %v695 = vpop.permute.xlu0 %694
    %698 = vset.pattern.permute.xlu0 0
    %699 = vperm.xlu0 %698, %v673
    %v700 = vpop.permute.xlu0 %699
    %703 = vset.pattern.permute.xlu0 0
    %704 = vperm.xlu0 %703, %v674
    %v705 = vpop.permute.xlu0 %704
    %708 = vset.pattern.permute.xlu0 0
    %709 = vperm.xlu0 %708, %v675
    %v710 = vpop.permute.xlu0 %709
    %713 = vset.pattern.permute.xlu0 0
    %714 = vperm.xlu0 %713, %v676
    %v715 = vpop.permute.xlu0 %714
    %718 = vset.pattern.permute.xlu0 0
    %719 = vperm.xlu0 %718, %v677
    %v720 = vpop.permute.xlu0 %719
    %723 = vset.pattern.permute.xlu0 0
    %724 = vperm.xlu0 %723, %v678
    %v725 = vpop.permute.xlu0 %724
    %728 = vset.pattern.permute.xlu0 0
    %729 = vperm.xlu0 %728, %v679
    %v730 = vpop.permute.xlu0 %729
    %733 = vset.pattern.permute.xlu0 0
    %734 = vperm.xlu0 %733, %v680
    %v735 = vpop.permute.xlu0 %734
    %738 = vset.pattern.permute.xlu0 0
    %739 = vperm.xlu0 %738, %v681
    %v740 = vpop.permute.xlu0 %739
    %743 = vset.pattern.permute.xlu0 0
    %744 = vperm.xlu0 %743, %v682
    %v745 = vpop.permute.xlu0 %744
    %748 = vset.pattern.permute.xlu0 0
    %749 = vperm.xlu0 %748, %v683
    %v750 = vpop.permute.xlu0 %749
    %753 = vset.pattern.permute.xlu0 0
    %754 = vperm.xlu0 %753, %v684
    %v755 = vpop.permute.xlu0 %754
    %758 = vset.pattern.permute.xlu0 0
    %759 = vperm.xlu0 %758, %v685
    %v760 = vpop.permute.xlu0 %759
    %763 = vset.pattern.permute.xlu0 0
    %764 = vperm.xlu0 %763, %v686
    %v765 = vpop.permute.xlu0 %764
    %767 = vmatprep.subr.mxu0 0.0
    %768 = vmatpush1.msra.mxu0 %v639
    %769 = vmatprep.subr.mxu0 0.0
    %770 = vmatpush1.msra.mxu0 %v640
    %771 = vmatprep.subr.mxu0 0.0
    %772 = vmatpush1.msra.mxu0 %v641
    %773 = vmatprep.subr.mxu0 0.0
    %774 = vmatpush1.msra.mxu0 %v642
    %775 = vmatprep.subr.mxu0 0.0
    %776 = vmatpush1.msra.mxu0 %v643
    %777 = vmatprep.subr.mxu0 0.0
    %778 = vmatpush1.msra.mxu0 %v644
    %779 = vmatprep.subr.mxu0 0.0
    %780 = vmatpush1.msra.mxu0 %v645
    %781 = vmatprep.subr.mxu0 0.0
    %782 = vmatpush1.msra.mxu0 %v646
    %783 = vmatprep.subr.mxu0 0.0
    %784 = vmatpush1.msra.mxu0 %v647
    %785 = vmatprep.subr.mxu0 0.0
    %786 = vmatpush1.msra.mxu0 %v648
    %787 = vmatprep.subr.mxu0 0.0
    %788 = vmatpush1.msra.mxu0 %v649
    %789 = vmatprep.subr.mxu0 0.0
    %790 = vmatpush1.msra.mxu0 %v650
    %791 = vmatprep.subr.mxu0 0.0
    %792 = vmatpush1.msra.mxu0 %v651
    %793 = vmatprep.subr.mxu0 0.0
    %794 = vmatpush1.msra.mxu0 %v652
    %795 = vmatprep.subr.mxu0 0.0
    %796 = vmatpush1.msra.mxu0 %v653
    %797 = vmatprep.subr.mxu0 0.0
    %798 = vmatpush1.msra.mxu0 %v654
    %799 = vmatprep.subr.mxu0 0.0
    %800 = vmatpush1.msra.mxu0 0.0
    %801 = vmatprep.subr.mxu0 0.0
    %802 = vmatpush1.msra.mxu0 0.0
    %803 = vmatprep.subr.mxu0 0.0
    %804 = vmatpush1.msra.mxu0 0.0
    %805 = vmatprep.subr.mxu0 0.0
    %806 = vmatpush1.msra.mxu0 0.0
    %807 = vmatprep.subr.mxu0 0.0
    %808 = vmatpush1.msra.mxu0 0.0
    %809 = vmatprep.subr.mxu0 0.0
    %810 = vmatpush1.msra.mxu0 0.0
    %811 = vmatprep.subr.mxu0 0.0
    %812 = vmatpush1.msra.mxu0 0.0
    %813 = vmatprep.subr.mxu0 0.0
    %814 = vmatpush1.msra.mxu0 0.0
    %815 = vmatprep.subr.mxu0 0.0
    %816 = vmatpush1.msra.mxu0 0.0
    %817 = vmatprep.subr.mxu0 0.0
    %818 = vmatpush1.msra.mxu0 0.0
    %819 = vmatprep.subr.mxu0 0.0
    %820 = vmatpush1.msra.mxu0 0.0
    %821 = vmatprep.subr.mxu0 0.0
    %822 = vmatpush1.msra.mxu0 0.0
    %823 = vmatprep.subr.mxu0 0.0
    %824 = vmatpush1.msra.mxu0 0.0
    %825 = vmatprep.subr.mxu0 0.0
    %826 = vmatpush1.msra.mxu0 0.0
    %827 = vmatprep.subr.mxu0 0.0
    %828 = vmatpush1.msra.mxu0 0.0
    %829 = vmatprep.subr.mxu0 0.0
    %830 = vmatpush1.msra.mxu0 0.0
    %831 = vmatprep.mubr.f32.mxu0 0.0
    %832 = vmatmul.mubr.f32.gmra.mrb[0].mxu0 %v655
    %v833 = vpop.f32.mrb[0].mxu0
    %v834 = vadd.f32 %v690, %v833
    %v835 = vpop.f32.mrb[0].mxu0
    %836 = vmatprep.mubr.f32.mxu0 0.0
    %837 = vmatmul.mubr.f32.gmra.mrb[0].mxu0 %v656
    %v838 = vpop.f32.mrb[0].mxu0
    %v839 = vadd.f32 %v695, %v838
    %v840 = vpop.f32.mrb[0].mxu0
    %841 = vmatprep.mubr.f32.mxu0 0.0
    %842 = vmatmul.mubr.f32.gmra.mrb[0].mxu0 %v657
    %v843 = vpop.f32.mrb[0].mxu0
    %v844 = vadd.f32 %v700, %v843
    %v845 = vpop.f32.mrb[0].mxu0
    %846 = vmatprep.mubr.f32.mxu0 0.0
    %847 = vmatmul.mubr.f32.gmra.mrb[0].mxu0 %v658
    %v848 = vpop.f32.mrb[0].mxu0
    %v849 = vadd.f32 %v705, %v848
    %v850 = vpop.f32.mrb[0].mxu0
    %851 = vmatprep.mubr.f32.mxu0 0.0
    %852 = vmatmul.mubr.f32.gmra.mrb[0].mxu0 %v659
    %v853 = vpop.f32.mrb[0].mxu0
    %v854 = vadd.f32 %v710, %v853
    %v855 = vpop.f32.mrb[0].mxu0
    %856 = vmatprep.mubr.f32.mxu0 0.0
    %857 = vmatmul.mubr.f32.gmra.mrb[0].mxu0 %v660
    %v858 = vpop.f32.mrb[0].mxu0
    %v859 = vadd.f32 %v715, %v858
    %v860 = vpop.f32.mrb[0].mxu0
    %861 = vmatprep.mubr.f32.mxu0 0.0
    %862 = vmatmul.mubr.f32.gmra.mrb[0].mxu0 %v661
    %v863 = vpop.f32.mrb[0].mxu0
    %v864 = vadd.f32 %v720, %v863
    %v865 = vpop.f32.mrb[0].mxu0
    %866 = vmatprep.mubr.f32.mxu0 0.0
    %867 = vmatmul.mubr.f32.gmra.mrb[0].mxu0 %v662
    %v868 = vpop.f32.mrb[0].mxu0
    %v869 = vadd.f32 %v725, %v868
    %v870 = vpop.f32.mrb[0].mxu0
    %871 = vmatprep.mubr.f32.mxu0 0.0
    %872 = vmatmul.mubr.f32.gmra.mrb[0].mxu0 %v663
    %v873 = vpop.f32.mrb[0].mxu0
    %v874 = vadd.f32 %v730, %v873
    %v875 = vpop.f32.mrb[0].mxu0
    %876 = vmatprep.mubr.f32.mxu0 0.0
    %877 = vmatmul.mubr.f32.gmra.mrb[0].mxu0 %v664
    %v878 = vpop.f32.mrb[0].mxu0
    %v879 = vadd.f32 %v735, %v878
    %v880 = vpop.f32.mrb[0].mxu0
    %881 = vmatprep.mubr.f32.mxu0 0.0
    %882 = vmatmul.mubr.f32.gmra.mrb[0].mxu0 %v665
    %v883 = vpop.f32.mrb[0].mxu0
    %v884 = vadd.f32 %v740, %v883
    %v885 = vpop.f32.mrb[0].mxu0
    %886 = vmatprep.mubr.f32.mxu0 0.0
    %887 = vmatmul.mubr.f32.gmra.mrb[0].mxu0 %v666
    %v888 = vpop.f32.mrb[0].mxu0
    %v889 = vadd.f32 %v745, %v888
    %v890 = vpop.f32.mrb[0].mxu0
    %891 = vmatprep.mubr.f32.mxu0 0.0
    %892 = vmatmul.mubr.f32.gmra.mrb[0].mxu0 %v667
    %v893 = vpop.f32.mrb[0].mxu0
    %v894 = vadd.f32 %v750, %v893
    %v895 = vpop.f32.mrb[0].mxu0
    %896 = vmatprep.mubr.f32.mxu0 0.0
    %897 = vmatmul.mubr.f32.gmra.mrb[0].mxu0 %v668
    %v898 = vpop.f32.mrb[0].mxu0
    %v899 = vadd.f32 %v755, %v898
    %v900 = vpop.f32.mrb[0].mxu0
    %901 = vmatprep.mubr.f32.mxu0 0.0
    %902 = vmatmul.mubr.f32.gmra.mrb[0].mxu0 %v669
    %v903 = vpop.f32.mrb[0].mxu0
    %v904 = vadd.f32 %v760, %v903
    %v905 = vpop.f32.mrb[0].mxu0
    %906 = vmatprep.mubr.f32.mxu0 0.0
    %907 = vmatmul.mubr.f32.gmra.mrb[0].mxu0 %v670
    %v908 = vpop.f32.mrb[0].mxu0
    %v909 = vadd.f32 %v765, %v908
    %v910 = vpop.f32.mrb[0].mxu0
    %911 = vdwg.mxu0
    %v912 = vtanh.pop %v834
    %v913 = vtanh.pop %v839
    %v914 = vtanh.pop %v844
    %v915 = vtanh.pop %v849
    %v916 = vtanh.pop %v854
    %v917 = vtanh.pop %v859
    %v918 = vtanh.pop %v864
    %v919 = vtanh.pop %v869
    %v920 = vtanh.pop %v874
    %v921 = vtanh.pop %v879
    %v922 = vtanh.pop %v884
    %v923 = vtanh.pop %v889
    %v924 = vtanh.pop %v894
    %v925 = vtanh.pop %v899
    %v926 = vtanh.pop %v904
    %v927 = vtanh.pop %v909
    %v928 = vld [vmem:[%s4] sm:$0xff]
    %v929 = vld [vmem:[%s4 + $0x8] sm:$0xff]
    %v930 = vld [vmem:[%s4 + $0x10] sm:$0xff]
    %v931 = vld [vmem:[%s4 + $0x18] sm:$0xff]
    %v932 = vld [vmem:[%s4 + $0x20] sm:$0xff]
    %v933 = vld [vmem:[%s4 + $0x28] sm:$0xff]
    %v934 = vld [vmem:[%s4 + $0x30] sm:$0xff]
    %v935 = vld [vmem:[%s4 + $0x38] sm:$0xff]
    %v936 = vld [vmem:[%s4 + $0x40] sm:$0xff]
    %v937 = vld [vmem:[%s4 + $0x48] sm:$0xff]
    %v938 = vld [vmem:[%s4 + $0x50] sm:$0xff]
    %v939 = vld [vmem:[%s4 + $0x58] sm:$0xff]
    %v940 = vld [vmem:[%s4 + $0x60] sm:$0xff]
    %v941 = vld [vmem:[%s4 + $0x68] sm:$0xff]
    %v942 = vld [vmem:[%s4 + $0x70] sm:$0xff]
    %v943 = vld [vmem:[%s4 + $0x78] sm:$0xff]
    %945 = vset.pattern.permute.xlu0 0
    %946 = vperm.xlu0 %945, %v928
    %v947 = vpop.permute.xlu0 %946
    %950 = vset.pattern.permute.xlu0 0
    %951 = vperm.xlu0 %950, %v929
    %v952 = vpop.permute.xlu0 %951
    %955 = vset.pattern.permute.xlu0 0
    %956 = vperm.xlu0 %955, %v930
    %v957 = vpop.permute.xlu0 %956
    %960 = vset.pattern.permute.xlu0 0
    %961 = vperm.xlu0 %960, %v931
    %v962 = vpop.permute.xlu0 %961
    %965 = vset.pattern.permute.xlu0 0
    %966 = vperm.xlu0 %965, %v932
    %v967 = vpop.permute.xlu0 %966
    %970 = vset.pattern.permute.xlu0 0
    %971 = vperm.xlu0 %970, %v933
    %v972 = vpop.permute.xlu0 %971
    %975 = vset.pattern.permute.xlu0 0
    %976 = vperm.xlu0 %975, %v934
    %v977 = vpop.permute.xlu0 %976
    %980 = vset.pattern.permute.xlu0 0
    %981 = vperm.xlu0 %980, %v935
    %v982 = vpop.permute.xlu0 %981
    %985 = vset.pattern.permute.xlu0 0
    %986 = vperm.xlu0 %985, %v936
    %v987 = vpop.permute.xlu0 %986
    %990 = vset.pattern.permute.xlu0 0
    %991 = vperm.xlu0 %990, %v937
    %v992 = vpop.permute.xlu0 %991
    %995 = vset.pattern.permute.xlu0 0
    %996 = vperm.xlu0 %995, %v938
    %v997 = vpop.permute.xlu0 %996
    %1000 = vset.pattern.permute.xlu0 0
    %1001 = vperm.xlu0 %1000, %v939
    %v1002 = vpop.permute.xlu0 %1001
    %1005 = vset.pattern.permute.xlu0 0
    %1006 = vperm.xlu0 %1005, %v940
    %v1007 = vpop.permute.xlu0 %1006
    %1010 = vset.pattern.permute.xlu0 0
    %1011 = vperm.xlu0 %1010, %v941
    %v1012 = vpop.permute.xlu0 %1011
    %1015 = vset.pattern.permute.xlu0 0
    %1016 = vperm.xlu0 %1015, %v942
    %v1017 = vpop.permute.xlu0 %1016
    %1020 = vset.pattern.permute.xlu0 0
    %1021 = vperm.xlu0 %1020, %v943
    %v1022 = vpop.permute.xlu0 %1021
    %v1024 = vmul.f32 %v912, %v947
    %v1025 = vmul.f32 %v913, %v952
    %v1026 = vmul.f32 %v914, %v957
    %v1027 = vmul.f32 %v915, %v962
    %v1028 = vmul.f32 %v916, %v967
    %v1029 = vmul.f32 %v917, %v972
    %v1030 = vmul.f32 %v918, %v977
    %v1031 = vmul.f32 %v919, %v982
    %v1032 = vmul.f32 %v920, %v987
    %v1033 = vmul.f32 %v921, %v992
    %v1034 = vmul.f32 %v922, %v997
    %v1035 = vmul.f32 %v923, %v1002
    %v1036 = vmul.f32 %v924, %v1007
    %v1037 = vmul.f32 %v925, %v1012
    %v1038 = vmul.f32 %v926, %v1017
    %v1039 = vmul.f32 %v927, %v1022
    %vm1040 = vcmask 64512
    %v1041 = vsel %vm1040, %v1024, 0.0
    %v1042 = vsel %vm1040, %v1025, 0.0
    %v1043 = vadd.f32 %v1041, %v1042
    %v1044 = vsel %vm1040, %v1026, 0.0
    %v1045 = vadd.f32 %v1043, %v1044
    %v1046 = vsel %vm1040, %v1027, 0.0
    %v1047 = vadd.f32 %v1045, %v1046
    %v1048 = vsel %vm1040, %v1028, 0.0
    %v1049 = vadd.f32 %v1047, %v1048
    %v1050 = vsel %vm1040, %v1029, 0.0
    %v1051 = vadd.f32 %v1049, %v1050
    %v1052 = vsel %vm1040, %v1030, 0.0
    %v1053 = vadd.f32 %v1051, %v1052
    %v1054 = vsel %vm1040, %v1031, 0.0
    %v1055 = vadd.f32 %v1053, %v1054
    %v1056 = vsel %vm1040, %v1032, 0.0
    %v1057 = vadd.f32 %v1055, %v1056
    %v1058 = vsel %vm1040, %v1033, 0.0
    %v1059 = vadd.f32 %v1057, %v1058
    %v1060 = vsel %vm1040, %v1034, 0.0
    %v1061 = vadd.f32 %v1059, %v1060
    %v1062 = vsel %vm1040, %v1035, 0.0
    %v1063 = vadd.f32 %v1061, %v1062
    %v1064 = vsel %vm1040, %v1036, 0.0
    %v1065 = vadd.f32 %v1063, %v1064
    %v1066 = vsel %vm1040, %v1037, 0.0
    %v1067 = vadd.f32 %v1065, %v1066
    %v1068 = vsel %vm1040, %v1038, 0.0
    %v1069 = vadd.f32 %v1067, %v1068
    %v1070 = vsel %vm1040, %v1039, 0.0
    %v1071 = vadd.f32 %v1069, %v1070
    %v1072 = vrot.slane %v1071, 4
    %v1073 = vadd.f32 %v1071, %v1072
    %v1074 = vrot.slane %v1073, 2
    %v1075 = vadd.f32 %v1073, %v1074
    %v1076 = vrot.slane %v1075, 1
    %v1077 = vadd.f32 %v1075, %v1076
    %s1078 = sld [smem:[#allocation2]]
    %v1079 = vstv %s1078
    %v1080 = vadd.f32 %v1077, %v1079
    %vm1081 = vcmask 57344
    %1082 = vst.msk [vmem:[#allocation6] sm:$0x1] %vm1081, %v1080
    // Predicated region
    $region30: #{tpu_custom_call.1} parent=1 // pred_check
      _
    $region31: #{tpu_custom_call.1} parent=1 // pred_check_branch
      %1084 = sbr.rel (0) target = $region33
    $region32: #{tpu_custom_call.1} parent=1 // pred_region
      %s1086 = ssub.s32 16, 16
      %1087 = vsyncadd [#allocation5], %s1086
      %s1089 = sshll.u32 [#allocation6], 4
      %s1090 = int_to_ptr.vmem [resolvable:$true] %s1089
      %1092 = dma.vmem_to_hbm [thread:$0]  %s1090, 16, %s6, [#allocation5]
    $region33: #{tpu_custom_call.1} parent=1 // pred_fallthru
      _
    // Predicated region
    $region34: #{tpu_custom_call.1} parent=1 // pred_check
      _
    $region35: #{tpu_custom_call.1} parent=1 // pred_check_branch
      %1094 = sbr.rel (0) target = $region37
    $region36: #{tpu_custom_call.1} parent=1 // pred_region
      %1095 = dma.done [#allocation5], 16
    $region37: #{tpu_custom_call.1} parent=1 // pred_fallthru
      _
    %1096 = vsyncpa [#allocation4], 1
    %1097 = vsyncpa [#allocation5], 1

</llo_original>
